<compile_context>
chip_gen: v7x
topology: tpu7x:2x2x1
jax: 0.10.0
libtpu: 0.0.40
codegen_flags: <defaults>
</compile_context>

<pallas_src>
import functools
import math

import jax
import jax.numpy as jnp
from jax import lax
from jax.experimental import pallas as pl
from jax.experimental.pallas import tpu as pltpu


def _attention_block(qb, kb, vb, num_heads, out_dtype):
    """qb: (S,E) bf16 with 1/sqrt(D) folded into the Q projection; kb/vb: (T,E) bf16.

    Returns the (S, E) attention output (heads concatenated along E) so the
    caller can issue a single lane-dense store per batch element.
    """
    S, E = qb.shape
    D = E // num_heads
    outs = []
    for h in range(num_heads):                       # static unroll over heads only
        sl = slice(h * D, (h + 1) * D)
        qh = qb[:, sl]                               # (S, D)
        kh = kb[:, sl]                               # (T, D)
        vh = vb[:, sl]                               # (T, D)

        # scores (S, T): contract on D directly so the transpose is absorbed
        # into the MXU operand feed (no XLU transpose of kh).
        att = lax.dot_general(qh, kh, (((1,), (1,)), ((), ())),
                              preferred_element_type=jnp.float32)

        # numerically-stable softmax, f32 elementwise, approx reciprocal on EUP
        att = att - jnp.max(att, axis=-1, keepdims=True)
        p = jnp.exp(att)
        p = p * pl.reciprocal(jnp.sum(p, axis=-1, keepdims=True), approx=True)

        outs.append(jnp.dot(p.astype(jnp.bfloat16), vh,
                            preferred_element_type=jnp.float32))     # (S, D)
    return jnp.concatenate(outs, axis=-1).astype(out_dtype)          # (S, E)


def _mha_kernel_fused_kv(q_ref, kv_ref, wq_ref, wkv_ref, bq_ref, bkv_ref,
                         o_ref, q_scr, k_scr, v_scr, *, num_heads):
    """One grid step == `block_n` batch elements; key/value share one source.

    q_ref  : (Bn, S, E) bf16      kv_ref : (Bn, T, E) bf16
    wq_ref : (E, E)   bf16  (1/sqrt(D) pre-folded)
    wkv_ref: (E, 2E)  bf16  ([Wk | Wv] packed along columns)
    bq_ref : (1, E)   f32   (1/sqrt(D) pre-folded)
    bkv_ref: (1, 2E)  f32
    o_ref  : (Bn, S, E)
    q_scr/k_scr/v_scr : bf16 VMEM scratch for the projected activations
    """
    Bn, S, E = q_ref.shape
    T = kv_ref.shape[1]

    # ---- batched projections: one matmul per tensor per grid step (M = Bn*S / Bn*T)
    xq = q_ref[...].reshape(Bn * S, E)
    xkv = kv_ref[...].reshape(Bn * T, E)
    q_all = jnp.dot(xq, wq_ref[...], preferred_element_type=jnp.float32) + bq_ref[...]
    kv_all = jnp.dot(xkv, wkv_ref[...], preferred_element_type=jnp.float32) + bkv_ref[...]

    q_scr[...] = q_all.reshape(Bn, S, E).astype(jnp.bfloat16)
    k_scr[...] = kv_all[:, :E].reshape(Bn, T, E).astype(jnp.bfloat16)
    v_scr[...] = kv_all[:, E:].reshape(Bn, T, E).astype(jnp.bfloat16)

    # ---- attention: fori_loop over the batch block (bounded live ranges)
    def body(b, carry):
        o_ref[b] = _attention_block(q_scr[b], k_scr[b], v_scr[b],
                                    num_heads, o_ref.dtype)
        return carry

    lax.fori_loop(0, Bn, body, 0)


def _mha_kernel_general(q_ref, k_ref, v_ref, wq_ref, wk_ref, wv_ref,
                        bq_ref, bk_ref, bv_ref, o_ref,
                        q_scr, k_scr, v_scr, *, num_heads):
    """General path: key and value are distinct tensors."""
    Bn, S, E = q_ref.shape
    T = k_ref.shape[1]

    xq = q_ref[...].reshape(Bn * S, E)
    xk = k_ref[...].reshape(Bn * T, E)
    xv = v_ref[...].reshape(Bn * T, E)
    q_all = jnp.dot(xq, wq_ref[...], preferred_element_type=jnp.float32) + bq_ref[...]
    k_all = jnp.dot(xk, wk_ref[...], preferred_element_type=jnp.float32) + bk_ref[...]
    v_all = jnp.dot(xv, wv_ref[...], preferred_element_type=jnp.float32) + bv_ref[...]

    q_scr[...] = q_all.reshape(Bn, S, E).astype(jnp.bfloat16)
    k_scr[...] = k_all.reshape(Bn, T, E).astype(jnp.bfloat16)
    v_scr[...] = v_all.reshape(Bn, T, E).astype(jnp.bfloat16)

    def body(b, carry):
        o_ref[b] = _attention_block(q_scr[b], k_scr[b], v_scr[b],
                                    num_heads, o_ref.dtype)
        return carry

    lax.fori_loop(0, Bn, body, 0)


def multi_head_attention(query, key, value, params, num_heads, block_n=None):
    """query: (N,S,E), key/value: (N,T,E). params: Wq/Wk/Wv (E,E), bq/bk/bv (E,)."""
    N, S, E = query.shape
    _, T, _ = value.shape
    assert E % num_heads == 0, "embed_dim must be divisible by num_heads"
    D = E // num_heads
    scale = 1.0 / math.sqrt(D)
    out_dtype = query.dtype

    fused_kv = key is value   # the module's documented self/cross-attn usage

    # bf16 activations at the pallas_call boundary; biases stay f32.
    q_in = query.astype(jnp.bfloat16)
    k_in = key.astype(jnp.bfloat16)
    v_in = value.astype(jnp.bfloat16)

    # Fold the 1/sqrt(D) attention scale into the Q projection (free at trace time).
    wq = (params["Wq"].astype(jnp.float32) * scale).astype(jnp.bfloat16)
    bq = (params["bq"].astype(jnp.float32) * scale).reshape(1, E)

    # Generation-aware VMEM budget (v7x has 64 MiB / TC, v5e/v6e have 128 MiB).
    try:
        vmem_cap = int(pltpu.get_tpu_info().vmem_capacity_bytes)
    except Exception:
        vmem_cap = 64 * 1024 * 1024
    vmem_limit = min((vmem_cap * 3) // 4, 96 * 1024 * 1024)

    # Block several batch elements per grid step (~8 MiB of bf16 activation
    # traffic), but keep >= 2 grid steps so both v7x TensorCores get work on
    # the 'parallel' axis.  block_n must divide N.
    if block_n is None:
        act_bytes = ((S * E + (1 if fused_kv else 2) * T * E) * 2
                     + S * E * jnp.dtype(out_dtype).itemsize)
        block_n = max(1, min(N, (8 * 1024 * 1024) // max(act_bytes, 1)))
        if N >= 2:
            block_n = max(1, min(block_n, N // 2))
        while N % block_n:
            block_n -= 1
    grid = (N // block_n,)

    def bmap3(n):
        return (n, 0, 0)

    def fixed2(n):
        return (0, 0)

    q_spec = pl.BlockSpec((block_n, S, E), bmap3)
    kv_spec = pl.BlockSpec((block_n, T, E), bmap3)
    o_spec = pl.BlockSpec((block_n, S, E), bmap3)

    scratch_shapes = [
        pltpu.VMEM((block_n, S, E), jnp.bfloat16),   # projected Q (pre-scaled)
        pltpu.VMEM((block_n, T, E), jnp.bfloat16),   # projected K
        pltpu.VMEM((block_n, T, E), jnp.bfloat16),   # projected V
    ]

    compiler_params = pltpu.CompilerParams(
        dimension_semantics=("parallel",),
        vmem_limit_bytes=vmem_limit,
    )

    if fused_kv:
        # fused K/V projection: one (E, 2E) matmul on the shared source tensor
        wkv = jnp.concatenate(
            [params["Wk"].astype(jnp.bfloat16), params["Wv"].astype(jnp.bfloat16)],
            axis=1)
        bkv = jnp.concatenate(
            [params["bk"].astype(jnp.float32), params["bv"].astype(jnp.float32)]
        ).reshape(1, 2 * E)
        kernel = functools.partial(_mha_kernel_fused_kv, num_heads=num_heads)
        grid_spec = pltpu.PrefetchScalarGridSpec(
            num_scalar_prefetch=0,
            grid=grid,
            in_specs=[
                q_spec, kv_spec,
                pl.BlockSpec((E, E), fixed2),        # Wq (bf16, pre-scaled)
                pl.BlockSpec((E, 2 * E), fixed2),    # [Wk | Wv] (bf16)
                pl.BlockSpec((1, E), fixed2),        # bq (pre-scaled, f32)
                pl.BlockSpec((1, 2 * E), fixed2),    # [bk | bv] (f32)
            ],
            out_specs=o_spec,
            scratch_shapes=scratch_shapes,
        )
        return pl.pallas_call(
            kernel,
            out_shape=jax.ShapeDtypeStruct((N, S, E), out_dtype),
            grid_spec=grid_spec,
            compiler_params=compiler_params,
        )(q_in, k_in, wq, wkv, bq, bkv)

    # general path (distinct key / value tensors)
    wk = params["Wk"].astype(jnp.bfloat16)
    wv = params["Wv"].astype(jnp.bfloat16)
    bk = params["bk"].astype(jnp.float32).reshape(1, E)
    bv = params["bv"].astype(jnp.float32).reshape(1, E)
    kernel = functools.partial(_mha_kernel_general, num_heads=num_heads)
    grid_spec = pltpu.PrefetchScalarGridSpec(
        num_scalar_prefetch=0,
        grid=grid,
        in_specs=[
            q_spec, kv_spec, kv_spec,
            pl.BlockSpec((E, E), fixed2),            # Wq (pre-scaled)
            pl.BlockSpec((E, E), fixed2),            # Wk
            pl.BlockSpec((E, E), fixed2),            # Wv
            pl.BlockSpec((1, E), fixed2),            # bq (pre-scaled)
            pl.BlockSpec((1, E), fixed2),            # bk
            pl.BlockSpec((1, E), fixed2),            # bv
        ],
        out_specs=o_spec,
        scratch_shapes=scratch_shapes,
    )
    return pl.pallas_call(
        kernel,
        out_shape=jax.ShapeDtypeStruct((N, S, E), out_dtype),
        grid_spec=grid_spec,
        compiler_params=compiler_params,
    )(q_in, k_in, v_in, wq, wk, wv, bq, bk, bv)


def multi_head_attention_ref(query, key, value, params, num_heads):
    """Pure-JAX f32 reference mirroring the PyTorch forward exactly."""
    N, S, E = query.shape
    _, T, _ = value.shape
    D = E // num_heads
    q = query @ params["Wq"] + params["bq"]
    k = key @ params["Wk"] + params["bk"]
    v = value @ params["Wv"] + params["bv"]
    q = q.reshape(N, S, num_heads, D).transpose(0, 2, 1, 3)           # (N,H,S,D)
    k = k.reshape(N, T, num_heads, D).transpose(0, 2, 3, 1)           # (N,H,D,T)
    v = v.reshape(N, T, num_heads, D).transpose(0, 2, 1, 3)           # (N,H,T,D)
    att = jnp.matmul(q, k) / math.sqrt(D)                             # (N,H,S,T)
    p = jax.nn.softmax(att, axis=-1)
    out = jnp.matmul(p, v)                                            # (N,H,S,D)
    return out.transpose(0, 2, 1, 3).reshape(N, S, E)


if __name__ == "__main__":
    # Small deterministic shapes consistent with the module's usage.
    # S/T chosen as multiples of 16 so the in-kernel (Bn,S,E)<->(Bn*S,E) bf16
    # reshapes are sublane-aligned (free views).
    N, S, T, E, H = 4, 16, 16, 32, 2

    key0 = jax.random.PRNGKey(0)
    k1, k2, k3, k4, k5, k6, k7, k8, k9 = jax.random.split(key0, 9)

    # nn.Linear-like parameters, stored as (in, out) so y = x @ W + b.
    scale = 1.0 / math.sqrt(E)
    params = {
        "Wq": jax.random.uniform(k1, (E, E), jnp.float32, -scale, scale),
        "Wk": jax.random.uniform(k2, (E, E), jnp.float32, -scale, scale),
        "Wv": jax.random.uniform(k3, (E, E), jnp.float32, -scale, scale),
        "bq": jax.random.uniform(k4, (E,), jnp.float32, -scale, scale),
        "bk": jax.random.uniform(k5, (E,), jnp.float32, -scale, scale),
        "bv": jax.random.uniform(k6, (E,), jnp.float32, -scale, scale),
    }

    query = jax.random.normal(k7, (N, S, E), jnp.float32)
    kv = jax.random.normal(k8, (N, T, E), jnp.float32)
    other_v = jax.random.normal(k9, (N, T, E), jnp.float32)

    # bf16 MXU operands vs the f32 reference -> loosened tolerance
    atol = rtol = 5e-2

    # 1) fused K/V path (key is value -- the module's documented usage)
    out = jax.block_until_ready(
        multi_head_attention(query, kv, kv, params, num_heads=H))
    ref = multi_head_attention_ref(query, kv, kv, params, H)
    assert out.shape == (N, S, E)
    assert out.dtype == query.dtype
    assert jnp.allclose(out, ref, atol=atol, rtol=rtol), "fused-KV mismatch vs reference"

    # 2) general path (distinct key / value tensors)
    out2 = jax.block_until_ready(
        multi_head_attention(query, kv, other_v, params, num_heads=H))
    ref2 = multi_head_attention_ref(query, kv, other_v, params, H)
    assert jnp.allclose(out2, ref2, atol=atol, rtol=rtol), "general-path mismatch vs reference"

    print("KERNEL_OK")
</pallas_src>

<mosaic_0001>
module attributes {stable_mosaic.version = 11 : i64} {
  func.func @_mha_kernel_fused_kv(%arg0: i32, %arg1: memref<2x16x32xbf16, #tpu.memory_space<vmem>>, %arg2: memref<2x16x32xbf16, #tpu.memory_space<vmem>>, %arg3: memref<32x32xbf16, #tpu.memory_space<vmem>>, %arg4: memref<32x64xbf16, #tpu.memory_space<vmem>>, %arg5: memref<1x32xf32, #tpu.memory_space<vmem>>, %arg6: memref<1x64xf32, #tpu.memory_space<vmem>>, %arg7: memref<2x16x32xf32, #tpu.memory_space<vmem>>, %arg8: memref<2x16x32xbf16, #tpu.memory_space<vmem>>, %arg9: memref<2x16x32xbf16, #tpu.memory_space<vmem>>, %arg10: memref<2x16x32xbf16, #tpu.memory_space<vmem>>) attributes {dimension_semantics = [#tpu.dimension_semantics<parallel>], iteration_bounds = array<i64: 2>, scalar_prefetch = 0 : i64, scratch_operands = 3 : i64, tpu.core_type = #tpu.core_type<tc>, window_params = [{transform_indices = @transform_0, window_bounds = array<i64: 2, 16, 32>}, {transform_indices = @transform_1, window_bounds = array<i64: 2, 16, 32>}, {pipeline_mode = #tpu.pipeline_mode<synchronous>, transform_indices = @transform_2, window_bounds = array<i64: 32, 32>}, {pipeline_mode = #tpu.pipeline_mode<synchronous>, transform_indices = @transform_3, window_bounds = array<i64: 32, 64>}, {pipeline_mode = #tpu.pipeline_mode<synchronous>, transform_indices = @transform_4, window_bounds = array<i64: 1, 32>}, {pipeline_mode = #tpu.pipeline_mode<synchronous>, transform_indices = @transform_5, window_bounds = array<i64: 1, 64>}, {transform_indices = @transform_6, window_bounds = array<i64: 2, 16, 32>}]} {
    %c0 = arith.constant 0 : index
    %c0_0 = arith.constant 0 : index
    %c0_1 = arith.constant 0 : index
    %0 = vector.load %arg1[%c0, %c0_0, %c0_1] : memref<2x16x32xbf16, #tpu.memory_space<vmem>>, vector<2x16x32xbf16>
    %1 = vector.shape_cast %0 : vector<2x16x32xbf16> to vector<32x32xbf16>
    %c0_2 = arith.constant 0 : index
    %c0_3 = arith.constant 0 : index
    %c0_4 = arith.constant 0 : index
    %2 = vector.load %arg2[%c0_2, %c0_3, %c0_4] : memref<2x16x32xbf16, #tpu.memory_space<vmem>>, vector<2x16x32xbf16>
    %3 = vector.shape_cast %2 : vector<2x16x32xbf16> to vector<32x32xbf16>
    %c0_5 = arith.constant 0 : index
    %c0_6 = arith.constant 0 : index
    %4 = vector.load %arg3[%c0_5, %c0_6] : memref<32x32xbf16, #tpu.memory_space<vmem>>, vector<32x32xbf16>
    %cst = arith.constant dense<0.000000e+00> : vector<32x32xf32>
    %5 = tpu.matmul %1, %4, %cst {dimension_numbers = #tpu.dot_dimension_numbers<[1], [0], [0], [1], [0, 0, 1, 1], [], []>} : vector<32x32xbf16>, vector<32x32xbf16>, vector<32x32xf32> -> vector<32x32xf32>
    %c0_7 = arith.constant 0 : index
    %c0_8 = arith.constant 0 : index
    %6 = vector.load %arg5[%c0_7, %c0_8] : memref<1x32xf32, #tpu.memory_space<vmem>>, vector<1x32xf32>
    %7 = vector.broadcast %6 : vector<1x32xf32> to vector<32x32xf32>
    %8 = arith.addf %5, %7 : vector<32x32xf32>
    %c0_9 = arith.constant 0 : index
    %c0_10 = arith.constant 0 : index
    %9 = vector.load %arg4[%c0_9, %c0_10] : memref<32x64xbf16, #tpu.memory_space<vmem>>, vector<32x64xbf16>
    %cst_11 = arith.constant dense<0.000000e+00> : vector<32x64xf32>
    %10 = tpu.matmul %3, %9, %cst_11 {dimension_numbers = #tpu.dot_dimension_numbers<[1], [0], [0], [1], [0, 0, 1, 1], [], []>} : vector<32x32xbf16>, vector<32x64xbf16>, vector<32x64xf32> -> vector<32x64xf32>
    %c0_12 = arith.constant 0 : index
    %c0_13 = arith.constant 0 : index
    %11 = vector.load %arg6[%c0_12, %c0_13] : memref<1x64xf32, #tpu.memory_space<vmem>>, vector<1x64xf32>
    %12 = vector.broadcast %11 : vector<1x64xf32> to vector<32x64xf32>
    %13 = arith.addf %10, %12 : vector<32x64xf32>
    %14 = vector.shape_cast %8 : vector<32x32xf32> to vector<2x16x32xf32>
    %15 = arith.truncf %14 : vector<2x16x32xf32> to vector<2x16x32xbf16>
    %c0_14 = arith.constant 0 : index
    %c0_15 = arith.constant 0 : index
    %c0_16 = arith.constant 0 : index
    %16 = vector.load %arg8[%c0_14, %c0_15, %c0_16] : memref<2x16x32xbf16, #tpu.memory_space<vmem>>, vector<2x16x32xbf16>
    tpu.vector_store %arg8[%c0_14, %c0_15, %c0_16], %15 {strides = array<i32>} : memref<2x16x32xbf16, #tpu.memory_space<vmem>>, vector<2x16x32xbf16>,
    %17 = vector.extract_strided_slice %13 {offsets = [0, 0], sizes = [32, 32], strides = [1, 1]} : vector<32x64xf32> to vector<32x32xf32>
    %18 = vector.shape_cast %17 : vector<32x32xf32> to vector<2x16x32xf32>
    %19 = arith.truncf %18 : vector<2x16x32xf32> to vector<2x16x32xbf16>
    %c0_17 = arith.constant 0 : index
    %c0_18 = arith.constant 0 : index
    %c0_19 = arith.constant 0 : index
    %20 = vector.load %arg9[%c0_17, %c0_18, %c0_19] : memref<2x16x32xbf16, #tpu.memory_space<vmem>>, vector<2x16x32xbf16>
    tpu.vector_store %arg9[%c0_17, %c0_18, %c0_19], %19 {strides = array<i32>} : memref<2x16x32xbf16, #tpu.memory_space<vmem>>, vector<2x16x32xbf16>,
    %21 = vector.extract_strided_slice %13 {offsets = [0, 32], sizes = [32, 32], strides = [1, 1]} : vector<32x64xf32> to vector<32x32xf32>
    %22 = vector.shape_cast %21 : vector<32x32xf32> to vector<2x16x32xf32>
    %23 = arith.truncf %22 : vector<2x16x32xf32> to vector<2x16x32xbf16>
    %c0_20 = arith.constant 0 : index
    %c0_21 = arith.constant 0 : index
    %c0_22 = arith.constant 0 : index
    %24 = vector.load %arg10[%c0_20, %c0_21, %c0_22] : memref<2x16x32xbf16, #tpu.memory_space<vmem>>, vector<2x16x32xbf16>
    tpu.vector_store %arg10[%c0_20, %c0_21, %c0_22], %23 {strides = array<i32>} : memref<2x16x32xbf16, #tpu.memory_space<vmem>>, vector<2x16x32xbf16>,
    %c0_i32 = arith.constant 0 : i32
    %c2_i32 = arith.constant 2 : i32
    %25 = arith.addi %c0_i32, %c2_i32 : i32
    %c1_i32 = arith.constant 1 : i32
    scf.for %arg11 = %c0_i32 to %25 step %c1_i32  : i32 {
      %26 = arith.index_cast %arg11 : i32 to index
      %c0_24 = arith.constant 0 : index
      %c0_25 = arith.constant 0 : index
      %27 = vector.load %arg8[%26, %c0_24, %c0_25] : memref<2x16x32xbf16, #tpu.memory_space<vmem>>, vector<1x16x32xbf16>
      %28 = vector.shape_cast %27 : vector<1x16x32xbf16> to vector<16x32xbf16>
      %29 = arith.index_cast %arg11 : i32 to index
      %c0_26 = arith.constant 0 : index
      %c0_27 = arith.constant 0 : index
      %30 = vector.load %arg9[%29, %c0_26, %c0_27] : memref<2x16x32xbf16, #tpu.memory_space<vmem>>, vector<1x16x32xbf16>
      %31 = vector.shape_cast %30 : vector<1x16x32xbf16> to vector<16x32xbf16>
      %32 = arith.index_cast %arg11 : i32 to index
      %c0_28 = arith.constant 0 : index
      %c0_29 = arith.constant 0 : index
      %33 = vector.load %arg10[%32, %c0_28, %c0_29] : memref<2x16x32xbf16, #tpu.memory_space<vmem>>, vector<1x16x32xbf16>
      %34 = vector.shape_cast %33 : vector<1x16x32xbf16> to vector<16x32xbf16>
      %35 = vector.extract_strided_slice %28 {offsets = [0, 0], sizes = [16, 16], strides = [1, 1]} : vector<16x32xbf16> to vector<16x16xbf16>
      %36 = vector.extract_strided_slice %31 {offsets = [0, 0], sizes = [16, 16], strides = [1, 1]} : vector<16x32xbf16> to vector<16x16xbf16>
      %37 = vector.extract_strided_slice %34 {offsets = [0, 0], sizes = [16, 16], strides = [1, 1]} : vector<16x32xbf16> to vector<16x16xbf16>
      %cst_30 = arith.constant dense<0.000000e+00> : vector<16x16xf32>
      %38 = tpu.matmul %35, %36, %cst_30 {dimension_numbers = #tpu.dot_dimension_numbers<[1], [1], [0], [0], [0, 0, 1, 0], [], []>} : vector<16x16xbf16>, vector<16x16xbf16>, vector<16x16xf32> -> vector<16x16xf32>
      %cst_31 = arith.constant dense<0xFF800000> : vector<16xf32>
      %39 = vector.multi_reduction <maximumf>, %38, %cst_31 [1] : vector<16x16xf32> to vector<16xf32>
      %40 = vector.shape_cast %39 : vector<16xf32> to vector<16x1xf32>
      %41 = vector.broadcast %40 : vector<16x1xf32> to vector<16x16xf32>
      %42 = arith.subf %38, %41 : vector<16x16xf32>
      %43 = math.exp %42 : vector<16x16xf32>
      %cst_32 = arith.constant dense<0.000000e+00> : vector<16xf32>
      %44 = vector.multi_reduction <add>, %43, %cst_32 [1] : vector<16x16xf32> to vector<16xf32>
      %45 = vector.shape_cast %44 : vector<16xf32> to vector<16x1xf32>
      %46 = tpu.reciprocal %45 {approx = true} : vector<16x1xf32> -> vector<16x1xf32>
      %47 = vector.broadcast %46 : vector<16x1xf32> to vector<16x16xf32>
      %48 = arith.mulf %43, %47 : vector<16x16xf32>
      %49 = arith.truncf %48 : vector<16x16xf32> to vector<16x16xbf16>
      %cst_33 = arith.constant dense<0.000000e+00> : vector<16x16xf32>
      %50 = tpu.matmul %49, %37, %cst_33 {dimension_numbers = #tpu.dot_dimension_numbers<[1], [0], [0], [1], [0, 0, 1, 1], [], []>} : vector<16x16xbf16>, vector<16x16xbf16>, vector<16x16xf32> -> vector<16x16xf32>
      %51 = vector.extract_strided_slice %28 {offsets = [0, 16], sizes = [16, 16], strides = [1, 1]} : vector<16x32xbf16> to vector<16x16xbf16>
      %52 = vector.extract_strided_slice %31 {offsets = [0, 16], sizes = [16, 16], strides = [1, 1]} : vector<16x32xbf16> to vector<16x16xbf16>
      %53 = vector.extract_strided_slice %34 {offsets = [0, 16], sizes = [16, 16], strides = [1, 1]} : vector<16x32xbf16> to vector<16x16xbf16>
      %cst_34 = arith.constant dense<0.000000e+00> : vector<16x16xf32>
      %54 = tpu.matmul %51, %52, %cst_34 {dimension_numbers = #tpu.dot_dimension_numbers<[1], [1], [0], [0], [0, 0, 1, 0], [], []>} : vector<16x16xbf16>, vector<16x16xbf16>, vector<16x16xf32> -> vector<16x16xf32>
      %cst_35 = arith.constant dense<0xFF800000> : vector<16xf32>
      %55 = vector.multi_reduction <maximumf>, %54, %cst_35 [1] : vector<16x16xf32> to vector<16xf32>
      %56 = vector.shape_cast %55 : vector<16xf32> to vector<16x1xf32>
      %57 = vector.broadcast %56 : vector<16x1xf32> to vector<16x16xf32>
      %58 = arith.subf %54, %57 : vector<16x16xf32>
      %59 = math.exp %58 : vector<16x16xf32>
      %cst_36 = arith.constant dense<0.000000e+00> : vector<16xf32>
      %60 = vector.multi_reduction <add>, %59, %cst_36 [1] : vector<16x16xf32> to vector<16xf32>
      %61 = vector.shape_cast %60 : vector<16xf32> to vector<16x1xf32>
      %62 = tpu.reciprocal %61 {approx = true} : vector<16x1xf32> -> vector<16x1xf32>
      %63 = vector.broadcast %62 : vector<16x1xf32> to vector<16x16xf32>
      %64 = arith.mulf %59, %63 : vector<16x16xf32>
      %65 = arith.truncf %64 : vector<16x16xf32> to vector<16x16xbf16>
      %cst_37 = arith.constant dense<0.000000e+00> : vector<16x16xf32>
      %66 = tpu.matmul %65, %53, %cst_37 {dimension_numbers = #tpu.dot_dimension_numbers<[1], [0], [0], [1], [0, 0, 1, 1], [], []>} : vector<16x16xbf16>, vector<16x16xbf16>, vector<16x16xf32> -> vector<16x16xf32>
      %67 = tpu.concatenate %50, %66 in 1 : vector<16x16xf32>, vector<16x16xf32> -> vector<16x32xf32>
      %68 = arith.index_cast %arg11 : i32 to index
      %c0_38 = arith.constant 0 : index
      %c0_39 = arith.constant 0 : index
      %69 = vector.load %arg7[%68, %c0_38, %c0_39] : memref<2x16x32xf32, #tpu.memory_space<vmem>>, vector<1x16x32xf32>
      %70 = vector.shape_cast %69 : vector<1x16x32xf32> to vector<16x32xf32>
      %71 = vector.shape_cast %67 : vector<16x32xf32> to vector<1x16x32xf32>
      tpu.vector_store %arg7[%68, %c0_38, %c0_39], %71 {strides = array<i32>} : memref<2x16x32xf32, #tpu.memory_space<vmem>>, vector<1x16x32xf32>,
    }
    %c2_i32_23 = arith.constant 2 : i32
    return
  }
  func.func @transform_0(%arg0: i32) -> (i32, i32, i32) {
    %c0_i32 = arith.constant 0 : i32
    %c0_i32_0 = arith.constant 0 : i32
    %c0_i32_1 = arith.constant 0 : i32
    return %arg0, %c0_i32, %c0_i32_0 : i32, i32, i32
  }
  func.func @transform_1(%arg0: i32) -> (i32, i32, i32) {
    %c0_i32 = arith.constant 0 : i32
    %c0_i32_0 = arith.constant 0 : i32
    %c0_i32_1 = arith.constant 0 : i32
    return %arg0, %c0_i32, %c0_i32_0 : i32, i32, i32
  }
  func.func @transform_2(%arg0: i32) -> (i32, i32) {
    %c0_i32 = arith.constant 0 : i32
    %c0_i32_0 = arith.constant 0 : i32
    %c0_i32_1 = arith.constant 0 : i32
    return %c0_i32, %c0_i32_0 : i32, i32
  }
  func.func @transform_3(%arg0: i32) -> (i32, i32) {
    %c0_i32 = arith.constant 0 : i32
    %c0_i32_0 = arith.constant 0 : i32
    %c0_i32_1 = arith.constant 0 : i32
    return %c0_i32, %c0_i32_0 : i32, i32
  }
  func.func @transform_4(%arg0: i32) -> (i32, i32) {
    %c0_i32 = arith.constant 0 : i32
    %c0_i32_0 = arith.constant 0 : i32
    %c0_i32_1 = arith.constant 0 : i32
    return %c0_i32, %c0_i32_0 : i32, i32
  }
  func.func @transform_5(%arg0: i32) -> (i32, i32) {
    %c0_i32 = arith.constant 0 : i32
    %c0_i32_0 = arith.constant 0 : i32
    %c0_i32_1 = arith.constant 0 : i32
    return %c0_i32, %c0_i32_0 : i32, i32
  }
  func.func @transform_6(%arg0: i32) -> (i32, i32, i32) {
    %c0_i32 = arith.constant 0 : i32
    %c0_i32_0 = arith.constant 0 : i32
    %c0_i32_1 = arith.constant 0 : i32
    return %arg0, %c0_i32, %c0_i32_0 : i32, i32, i32
  }
}

</mosaic_0001>

<llo_original>
// kernel: tpu_custom_call.1
$region0: #{tpu_custom_call.1}
  #allocation0 [shape = 'u32[]', space=smem, size = 0x4, offset = 0x4, fixed_abs, tag = 'smem constant byte address 0x4 - core index']
  #allocation1 [shape = 'u32[144,128]{1,0:T(1,128)}', space=vmem, size = 0x12000, scoped, tag = 'internal scratch']
  #allocation2 [shape = 'bf16[2,16,32]{2,1,0:T(16,128)(2,1)}', space=vmem, size = 0x2000, scoped, tag = 'scratch operand']
  #allocation3 [shape = 'bf16[2,16,32]{2,1,0:T(16,128)(2,1)}', space=vmem, size = 0x2000, scoped, tag = 'scratch operand']
  #allocation4 [shape = 'bf16[2,16,32]{2,1,0:T(16,128)(2,1)}', space=vmem, size = 0x2000, scoped, tag = 'scratch operand']
  %s0 = inlined_call_operand.hbm [shape: bf16[4,16,32], index: 0, kind: input, shape index: {}]
  %s1 = inlined_call_operand.hbm [shape: bf16[4,16,32], index: 1, kind: input, shape index: {}]
  %s2 = inlined_call_operand.hbm [shape: bf16[32,32], index: 2, kind: input, shape index: {}]
  %s3 = inlined_call_operand.hbm [shape: bf16[32,64], index: 3, kind: input, shape index: {}]
  %s4 = inlined_call_operand.vmem [shape: f32[1,32], index: 4, kind: input, shape index: {}]
  %s5 = inlined_call_operand.vmem [shape: f32[1,64], index: 5, kind: input, shape index: {}]
  %s6 = inlined_call_operand.hbm [shape: f32[4,16,32], index: 6, kind: output, shape index: {}]
  %s7 = sld [smem:[#allocation0]]
  $region80: #{tpu_custom_call.1} parent=0
    _
  %s9 = ssub.s32 1, %s7
  %s10 = scalar_select 0, %s9, %s7
  $region1: #{tpu_custom_call.1} parent=0
    #allocation5 [shape = 'u8[16384]{0}', space=vmem, size = 0x4000, scoped, tag = 'input window, operand 0']
    #allocation6 [shape = 's32[2]{0}', space=sflag, size = 0x8, scoped, tag = 'scoped memory for tpu_custom_call.1']
    #allocation7 [shape = 's32[2]{0}', space=sflag, size = 0x8, scoped, tag = 'scoped memory for tpu_custom_call.1']
    #allocation8 [shape = 'u8[16384]{0}', space=vmem, size = 0x4000, scoped, tag = 'input window, operand 1']
    #allocation9 [shape = 's32[2]{0}', space=sflag, size = 0x8, scoped, tag = 'scoped memory for tpu_custom_call.1']
    #allocation10 [shape = 'u8[8192]{0}', space=vmem, size = 0x2000, scoped, tag = 'input window, operand 2, single buffered']
    #allocation11 [shape = 'u8[8192]{0}', space=vmem, size = 0x2000, scoped, tag = 'input window, operand 3, single buffered']
    #allocation12 [shape = 's32[1]{0}', space=sflag, size = 0x4, scoped, tag = 'scoped memory for tpu_custom_call.1']
    #allocation13 [shape = 'u8[32768]{0}', space=vmem, size = 0x8000, scoped, tag = 'output window, operand 0']
    %11 = vsyncpa [#allocation6], 0
    %s12 = scalar_lea.sflag [#allocation6], 1
    %13 = vsyncpa %s12, 0
    %14 = vsyncpa [#allocation9], 0
    %s15 = scalar_lea.sflag [#allocation9], 1
    %16 = vsyncpa %s15, 0
    %17 = vsyncpa [#allocation12], 0
    %18 = vsyncpa [#allocation7], 0
    %s19 = scalar_lea.sflag [#allocation7], 1
    %20 = vsyncpa %s19, 0
    loop: start=0, step=1, limit=4
    $region2: #{tpu_custom_call.1} parent=1 // loop_pre_header
      _
    $region3: #{tpu_custom_call.1} parent=1 // loop_header
      %s22 = sphi 0, %s26
      %p23 = scmp.ge.s32.totalorder %s22, 4
      %s32 = sphi 0, %s34
      %s35 = sphi 0, %s32
      %s36 = sphi 0, %s35
      %s52 = sphi 0, %s36
      %s58 = sphi 0, %s60
      %s61 = sphi 0, %s58
      %s62 = sphi 0, %s61
      %s78 = sphi 0, %s62
      %s82 = sphi 0, %s82
      %s84 = sphi 0, %s82
      %s85 = sphi 0, %s84
      %s99 = sphi 0, %s85
      %s103 = sphi 0, %s103
      %s105 = sphi 0, %s103
      %s106 = sphi 0, %s105
      %s120 = sphi 0, %s106
      %s124 = sphi 0, %s124
      %s126 = sphi 0, %s124
      %s127 = sphi 0, %s126
      %s141 = sphi 0, %s127
      %s145 = sphi 0, %s145
      %s147 = sphi 0, %s145
      %s148 = sphi 0, %s147
      %s162 = sphi 0, %s148
      %s168 = sphi 0, %s170
      %s171 = sphi 0, %s168
      %s172 = sphi 0, %s171
      %s188 = sphi 0, %s172
    $region4: #{tpu_custom_call.1} parent=1 // loop_header_branch
      %25 = sbr.rel (%p23) target = $region8
    $region5: #{tpu_custom_call.1} parent=1 // loop_body
      %s27 = ssub.s32 %s22, 1
      %s28 = ssub.s32 %s22, 2
      %s29 = sadd.s32 %s22, 1
      %s30 = ssub.s32 %s22, %s29
      %p31 = scmp.eq.s32.totalorder %s30, 0
      %s33 = sadd.s32 %s32, 1
      %s34 = scalar_select %p31, %s32, %s33
      %p37 = pneg %p31
      %p38 = scmp.eq.s32.totalorder %s22, 1
      %p39 = por %p37, %p38
      %p40 = scmp.ne.s32.totalorder %s32, %s35
      %p41 = scmp.eq.s32.totalorder %s22, 0
      %p42 = por %p40, %p41
      %p43 = scmp.ne.s32.totalorder %s32, %s35
      %p44 = scmp.eq.s32.totalorder %s27, 1
      %p45 = por %p43, %p44
      %p46 = scmp.ne.s32.totalorder %s35, %s36
      %p47 = scmp.eq.s32.totalorder %s27, 0
      %p48 = por %p46, %p47
      %p49 = scmp.ne.s32.totalorder %s35, %s36
      %p50 = scmp.eq.s32.totalorder %s28, 1
      %p51 = por %p49, %p50
      %p53 = scmp.ne.s32.totalorder %s36, %s52
      %p54 = scmp.eq.s32.totalorder %s28, 0
      %p55 = por %p53, %p54
      %s56 = ssub.s32 %s22, %s29
      %p57 = scmp.eq.s32.totalorder %s56, 0
      %s59 = sadd.s32 %s58, 1
      %s60 = scalar_select %p57, %s58, %s59
      %p63 = pneg %p57
      %p64 = scmp.eq.s32.totalorder %s22, 1
      %p65 = por %p63, %p64
      %p66 = scmp.ne.s32.totalorder %s58, %s61
      %p67 = scmp.eq.s32.totalorder %s22, 0
      %p68 = por %p66, %p67
      %p69 = scmp.ne.s32.totalorder %s58, %s61
      %p70 = scmp.eq.s32.totalorder %s27, 1
      %p71 = por %p69, %p70
      %p72 = scmp.ne.s32.totalorder %s61, %s62
      %p73 = scmp.eq.s32.totalorder %s27, 0
      %p74 = por %p72, %p73
      %p75 = scmp.ne.s32.totalorder %s61, %s62
      %p76 = scmp.eq.s32.totalorder %s28, 1
      %p77 = por %p75, %p76
      %p79 = scmp.ne.s32.totalorder %s62, %s78
      %p80 = scmp.eq.s32.totalorder %s28, 0
      %p81 = por %p79, %p80
      %s83 = sadd.s32 %s82, 1
      %p86 = scmp.eq.s32.totalorder %s22, 1
      %p87 = scmp.ne.s32.totalorder %s82, %s84
      %p88 = scmp.eq.s32.totalorder %s22, 0
      %p89 = por %p87, %p88
      %p90 = scmp.ne.s32.totalorder %s82, %s84
      %p91 = scmp.eq.s32.totalorder %s27, 1
      %p92 = por %p90, %p91
      %p93 = scmp.ne.s32.totalorder %s84, %s85
      %p94 = scmp.eq.s32.totalorder %s27, 0
      %p95 = por %p93, %p94
      %p96 = scmp.ne.s32.totalorder %s84, %s85
      %p97 = scmp.eq.s32.totalorder %s28, 1
      %p98 = por %p96, %p97
      %p100 = scmp.ne.s32.totalorder %s85, %s99
      %p101 = scmp.eq.s32.totalorder %s28, 0
      %p102 = por %p100, %p101
      %s104 = sadd.s32 %s103, 1
      %p107 = scmp.eq.s32.totalorder %s22, 1
      %p108 = scmp.ne.s32.totalorder %s103, %s105
      %p109 = scmp.eq.s32.totalorder %s22, 0
      %p110 = por %p108, %p109
      %p111 = scmp.ne.s32.totalorder %s103, %s105
      %p112 = scmp.eq.s32.totalorder %s27, 1
      %p113 = por %p111, %p112
      %p114 = scmp.ne.s32.totalorder %s105, %s106
      %p115 = scmp.eq.s32.totalorder %s27, 0
      %p116 = por %p114, %p115
      %p117 = scmp.ne.s32.totalorder %s105, %s106
      %p118 = scmp.eq.s32.totalorder %s28, 1
      %p119 = por %p117, %p118
      %p121 = scmp.ne.s32.totalorder %s106, %s120
      %p122 = scmp.eq.s32.totalorder %s28, 0
      %p123 = por %p121, %p122
      %s125 = sadd.s32 %s124, 1
      %p128 = scmp.eq.s32.totalorder %s22, 1
      %p129 = scmp.ne.s32.totalorder %s124, %s126
      %p130 = scmp.eq.s32.totalorder %s22, 0
      %p131 = por %p129, %p130
      %p132 = scmp.ne.s32.totalorder %s124, %s126
      %p133 = scmp.eq.s32.totalorder %s27, 1
      %p134 = por %p132, %p133
      %p135 = scmp.ne.s32.totalorder %s126, %s127
      %p136 = scmp.eq.s32.totalorder %s27, 0
      %p137 = por %p135, %p136
      %p138 = scmp.ne.s32.totalorder %s126, %s127
      %p139 = scmp.eq.s32.totalorder %s28, 1
      %p140 = por %p138, %p139
      %p142 = scmp.ne.s32.totalorder %s127, %s141
      %p143 = scmp.eq.s32.totalorder %s28, 0
      %p144 = por %p142, %p143
      %s146 = sadd.s32 %s145, 1
      %p149 = scmp.eq.s32.totalorder %s22, 1
      %p150 = scmp.ne.s32.totalorder %s145, %s147
      %p151 = scmp.eq.s32.totalorder %s22, 0
      %p152 = por %p150, %p151
      %p153 = scmp.ne.s32.totalorder %s145, %s147
      %p154 = scmp.eq.s32.totalorder %s27, 1
      %p155 = por %p153, %p154
      %p156 = scmp.ne.s32.totalorder %s147, %s148
      %p157 = scmp.eq.s32.totalorder %s27, 0
      %p158 = por %p156, %p157
      %p159 = scmp.ne.s32.totalorder %s147, %s148
      %p160 = scmp.eq.s32.totalorder %s28, 1
      %p161 = por %p159, %p160
      %p163 = scmp.ne.s32.totalorder %s148, %s162
      %p164 = scmp.eq.s32.totalorder %s28, 0
      %p165 = por %p163, %p164
      %s166 = ssub.s32 %s22, %s29
      %p167 = scmp.eq.s32.totalorder %s166, 0
      %s169 = sadd.s32 %s168, 1
      %s170 = scalar_select %p167, %s168, %s169
      %p173 = pneg %p167
      %p174 = scmp.eq.s32.totalorder %s22, 1
      %p175 = por %p173, %p174
      %p176 = scmp.ne.s32.totalorder %s168, %s171
      %p177 = scmp.eq.s32.totalorder %s22, 0
      %p178 = por %p176, %p177
      %p179 = scmp.ne.s32.totalorder %s168, %s171
      %p180 = scmp.eq.s32.totalorder %s27, 1
      %p181 = por %p179, %p180
      %p182 = scmp.ne.s32.totalorder %s171, %s172
      %p183 = scmp.eq.s32.totalorder %s27, 0
      %p184 = por %p182, %p183
      %p185 = scmp.ne.s32.totalorder %s171, %s172
      %p186 = scmp.eq.s32.totalorder %s28, 1
      %p187 = por %p185, %p186
      %p189 = scmp.ne.s32.totalorder %s172, %s188
      %p190 = scmp.eq.s32.totalorder %s28, 0
      %p191 = por %p189, %p190
      %p192 = scmp.le.s32.totalorder 1, %s22
      %p193 = scmp.lt.s32.totalorder %s22, 3
      %p194 = pnand %p192, %p193
      %p195 = pneg %p194
      // Predicated region
      $region9: #{tpu_custom_call.1} parent=5 // pred_check
        _
      $region10: #{tpu_custom_call.1} parent=5 // pred_check_branch
        %197 = sbr.rel (%p194) target = $region12
      $region11: #{tpu_custom_call.1} parent=5 // pred_region
        %s198 = ssub.s32 %s22, 1
        // Predicated region
        $region13: #{tpu_custom_call.1} parent=11 // pred_check
          %p199 = pneg %p95
        $region14: #{tpu_custom_call.1} parent=11 // pred_check_branch
          %201 = sbr.rel (%p199) target = $region16
        $region15: #{tpu_custom_call.1} parent=11 // pred_region
          %s203 = ssub.s32 256, 256
          %204 = vsyncadd [#allocation9], %s203
          %s205 = sshll.u32 [#allocation10], 4
          %s206 = int_to_ptr.vmem [resolvable:$true] %s205
          %211 = dma.hbm_to_vmem [thread:$0]  %s2, 256, %s206, [#allocation9], 64, 64, 4
        $region16: #{tpu_custom_call.1} parent=11 // pred_fallthru
          _
        // Predicated region
        $region17: #{tpu_custom_call.1} parent=11 // pred_check
          %p212 = pneg %p116
        $region18: #{tpu_custom_call.1} parent=11 // pred_check_branch
          %214 = sbr.rel (%p212) target = $region20
        $region19: #{tpu_custom_call.1} parent=11 // pred_region
          %s216 = ssub.s32 256, 256
          %217 = vsyncadd [#allocation12], %s216
          %s218 = sshll.u32 [#allocation11], 4
          %s219 = int_to_ptr.vmem [resolvable:$true] %s218
          %224 = dma.hbm_to_vmem [thread:$0]  %s3, 256, %s219, [#allocation12], 64, 64, 4
        $region20: #{tpu_custom_call.1} parent=11 // pred_fallthru
          _
        // Predicated region
        $region21: #{tpu_custom_call.1} parent=11 // pred_check
          %p225 = pneg %p137
        $region22: #{tpu_custom_call.1} parent=11 // pred_check_branch
          %227 = sbr.rel (%p225) target = $region24
        $region23: #{tpu_custom_call.1} parent=11 // pred_region
          _
        $region24: #{tpu_custom_call.1} parent=11 // pred_fallthru
          _
        // Predicated region
        $region25: #{tpu_custom_call.1} parent=11 // pred_check
          %p228 = pneg %p158
        $region26: #{tpu_custom_call.1} parent=11 // pred_check_branch
          %230 = sbr.rel (%p228) target = $region28
        $region27: #{tpu_custom_call.1} parent=11 // pred_region
          _
        $region28: #{tpu_custom_call.1} parent=11 // pred_fallthru
          _
      $region12: #{tpu_custom_call.1} parent=5 // pred_fallthru
        _
      %p231 = scmp.lt.s32.totalorder %s22, 2
      // Predicated region
      $region29: #{tpu_custom_call.1} parent=5 // pred_check
        %p232 = pneg %p231
      $region30: #{tpu_custom_call.1} parent=5 // pred_check_branch
        %234 = sbr.rel (%p232) target = $region32
      $region31: #{tpu_custom_call.1} parent=5 // pred_region
        // Predicated region
        $region33: #{tpu_custom_call.1} parent=31 // pred_check
          %p235 = pneg %p42
        $region34: #{tpu_custom_call.1} parent=31 // pred_check_branch
          %237 = sbr.rel (%p235) target = $region36
        $region35: #{tpu_custom_call.1} parent=31 // pred_region
          %s238 = sand.u32 %s32, 1
          %s239 = scalar_lea.sflag [#allocation6], %s238
          %s240 = sand.u32 %s32, 1
          %s241 = smul.addr %s240, 16
          %s242 = scalar_lea.vmem [#allocation5], %s241
          %s243 = smul.u32 2, %s22
          %s245 = ssub.s32 256, 256
          %246 = vsyncadd %s239, %s245
          %s247 = smul.addr %s243, 2
          %s248 = smul.addr %s247, 64
          %s249 = scalar_lea.hbm %s0, %s248
          %s250 = sshll.u32 %s242, 4
          %s251 = int_to_ptr.vmem [resolvable:$true] %s250
          %256 = dma.hbm_to_vmem [thread:$0]  %s249, 256, %s251, %s239, 64, 64, 4
        $region36: #{tpu_custom_call.1} parent=31 // pred_fallthru
          _
        // Predicated region
        $region37: #{tpu_custom_call.1} parent=31 // pred_check
          %p257 = pneg %p68
        $region38: #{tpu_custom_call.1} parent=31 // pred_check_branch
          %259 = sbr.rel (%p257) target = $region40
        $region39: #{tpu_custom_call.1} parent=31 // pred_region
          %s260 = sand.u32 %s22, 1
          %s261 = scalar_lea.sflag [#allocation9], %s260
          %s262 = sand.u32 %s58, 1
          %s263 = smul.addr %s262, 16
          %s264 = scalar_lea.vmem [#allocation8], %s263
          %s265 = smul.u32 2, %s22
          %s267 = ssub.s32 256, 256
          %268 = vsyncadd %s261, %s267
          %s269 = smul.addr %s265, 2
          %s270 = smul.addr %s269, 64
          %s271 = scalar_lea.hbm %s1, %s270
          %s272 = sshll.u32 %s264, 4
          %s273 = int_to_ptr.vmem [resolvable:$true] %s272
          %278 = dma.hbm_to_vmem [thread:$0]  %s271, 256, %s273, %s261, 64, 64, 4
        $region40: #{tpu_custom_call.1} parent=31 // pred_fallthru
          _
      $region32: #{tpu_custom_call.1} parent=5 // pred_fallthru
        _
      %p279 = scmp.le.s32.totalorder 1, %s22
      %p280 = scmp.lt.s32.totalorder %s22, 3
      %p281 = pnand %p279, %p280
      %p282 = pneg %p281
      // Predicated region
      $region41: #{tpu_custom_call.1} parent=5 // pred_check
        _
      $region42: #{tpu_custom_call.1} parent=5 // pred_check_branch
        %284 = sbr.rel (%p281) target = $region44
      $region43: #{tpu_custom_call.1} parent=5 // pred_region
        %s285 = ssub.s32 %s22, 1
        %s286 = sand.u32 %s35, 1
        %s287 = scalar_lea.sflag [#allocation6], %s286
        %s288 = sand.u32 %s35, 1
        %s289 = smul.addr %s288, 16
        %s290 = scalar_lea.vmem [#allocation5], %s289
        // Predicated region
        $region45: #{tpu_custom_call.1} parent=43 // pred_check
          %p291 = pneg %p48
        $region46: #{tpu_custom_call.1} parent=43 // pred_check_branch
          %293 = sbr.rel (%p291) target = $region48
        $region47: #{tpu_custom_call.1} parent=43 // pred_region
          %294 = dma.done %s287, 256
        $region48: #{tpu_custom_call.1} parent=43 // pred_fallthru
          _
        %s295 = sand.u32 %s27, 1
        %s296 = scalar_lea.sflag [#allocation9], %s295
        %s297 = sand.u32 %s61, 1
        %s298 = smul.addr %s297, 16
        %s299 = scalar_lea.vmem [#allocation8], %s298
        // Predicated region
        $region49: #{tpu_custom_call.1} parent=43 // pred_check
          %p300 = pneg %p74
        $region50: #{tpu_custom_call.1} parent=43 // pred_check_branch
          %302 = sbr.rel (%p300) target = $region52
        $region51: #{tpu_custom_call.1} parent=43 // pred_region
          %303 = dma.done %s296, 256
        $region52: #{tpu_custom_call.1} parent=43 // pred_fallthru
          _
        // Predicated region
        $region53: #{tpu_custom_call.1} parent=43 // pred_check
          %p304 = pneg %p95
        $region54: #{tpu_custom_call.1} parent=43 // pred_check_branch
          %306 = sbr.rel (%p304) target = $region56
        $region55: #{tpu_custom_call.1} parent=43 // pred_region
          %307 = dma.done [#allocation9], 256
        $region56: #{tpu_custom_call.1} parent=43 // pred_fallthru
          _
        // Predicated region
        $region57: #{tpu_custom_call.1} parent=43 // pred_check
          %p308 = pneg %p116
        $region58: #{tpu_custom_call.1} parent=43 // pred_check_branch
          %310 = sbr.rel (%p308) target = $region60
        $region59: #{tpu_custom_call.1} parent=43 // pred_region
          %311 = dma.done [#allocation12], 256
        $region60: #{tpu_custom_call.1} parent=43 // pred_fallthru
          _
        %s312 = sand.u32 %s35, 1
        %s313 = scalar_lea.sflag [#allocation6], %s312
        %s314 = sand.u32 %s35, 1
        %s315 = smul.addr %s314, 16
        %s316 = scalar_lea.vmem [#allocation5], %s315
        %p317 = pneg %p48
        %p318 = pneg %p45
        %s319 = sand.u32 %s27, 1
        %s320 = scalar_lea.sflag [#allocation9], %s319
        %s321 = sand.u32 %s61, 1
        %s322 = smul.addr %s321, 16
        %s323 = scalar_lea.vmem [#allocation8], %s322
        %p324 = pneg %p74
        %p325 = pneg %p71
        %p326 = pneg %p95
        %p327 = pneg %p92
        %p328 = pneg %p116
        %p329 = pneg %p113
        %p330 = pneg %p137
        %p331 = pneg %p134
        %p332 = pneg %p158
        %p333 = pneg %p155
        %p334 = pneg %p184
        %p335 = pneg %p181
        %s336 = sand.u32 %s171, 1
        %s337 = scalar_lea.sflag [#allocation7], %s336
        %s338 = sand.u32 %s171, 1
        %s339 = smul.addr %s338, 32
        %s340 = scalar_lea.vmem [#allocation13], %s339
        %s341 = smul.u32 2, %s27
        %s342 = smul.u32 2, %s27
        %s343 = smul.u32 2, %s27
        %v345 = vld [vmem:[%s290] sm:$0xf]
        %v346 = vld [vmem:[%s290 + $0x4] sm:$0xf]
        %v347 = vld [vmem:[%s290 + $0x8] sm:$0xf]
        %v348 = vld [vmem:[%s290 + $0xc] sm:$0xf]
        %v349 = vld [vmem:[%s299] sm:$0xf]
        %v350 = vld [vmem:[%s299 + $0x4] sm:$0xf]
        %v351 = vld [vmem:[%s299 + $0x8] sm:$0xf]
        %v352 = vld [vmem:[%s299 + $0xc] sm:$0xf]
        %v353 = vld [vmem:[#allocation10] sm:$0xf]
        %v354 = vld [vmem:[#allocation10 + $0x4] sm:$0xf]
        %v355 = vld [vmem:[#allocation10 + $0x8] sm:$0xf]
        %v356 = vld [vmem:[#allocation10 + $0xc] sm:$0xf]
        %v357 = vld [vmem:[%s4] sm:$0x1]
        %v359 = vlaneseq
        %v360 = vshrl.u32 %v359, 7
        %v361 = vsub.s32 0, %v360
        %v362 = vrot.slane %v357, %v361
        %v368 = vunpack.c.l.b16 %v345
        %v369 = vunpack.c.l.b16 %v346
        %v370 = vunpack.c.l.b16 %v347
        %v371 = vunpack.c.l.b16 %v348
        %v372 = vpack.c.b16 %v369, %v368
        %v373 = vpack.c.b16 %v371, %v370
        %v378 = vunpack.c.l.b16 %v353
        %v379 = vunpack.c.l.b16 %v354
        %v380 = vunpack.c.l.b16 %v355
        %v381 = vunpack.c.l.b16 %v356
        %v382 = vpack.c.b16 %v379, %v378
        %v383 = vpack.c.b16 %v381, %v380
        %vm386 = vcmask 261120
        %v388 = vsel %vm386, %v372, 0
        %v391 = vsel %vm386, %v373, 0
        %393 = vmatprep.subr.bf16.mxu0 0
        %394 = vmatpush1.bf16.msra.mxu0 %v382
        %395 = vmatprep.subr.bf16.mxu0 0
        %396 = vmatpush1.bf16.msra.mxu0 %v383
        %397 = vmatprep.subr.bf16.mxu0 0
        %398 = vmatpush1.bf16.msra.mxu0 0
        %399 = vmatprep.subr.bf16.mxu0 0
        %400 = vmatpush1.bf16.msra.mxu0 0
        %401 = vmatprep.subr.bf16.mxu0 0
        %402 = vmatpush1.bf16.msra.mxu0 0
        %403 = vmatprep.subr.bf16.mxu0 0
        %404 = vmatpush1.bf16.msra.mxu0 0
        %405 = vmatprep.subr.bf16.mxu0 0
        %406 = vmatpush1.bf16.msra.mxu0 0
        %407 = vmatprep.subr.bf16.mxu0 0
        %408 = vmatpush1.bf16.msra.mxu0 0
        %409 = vmatprep.subr.bf16.mxu0 0
        %410 = vmatpush1.bf16.msra.mxu0 0
        %411 = vmatprep.subr.bf16.mxu0 0
        %412 = vmatpush1.bf16.msra.mxu0 0
        %413 = vmatprep.subr.bf16.mxu0 0
        %414 = vmatpush1.bf16.msra.mxu0 0
        %415 = vmatprep.subr.bf16.mxu0 0
        %416 = vmatpush1.bf16.msra.mxu0 0
        %417 = vmatprep.subr.bf16.mxu0 0
        %418 = vmatpush1.bf16.msra.mxu0 0
        %419 = vmatprep.subr.bf16.mxu0 0
        %420 = vmatpush1.bf16.msra.mxu0 0
        %421 = vmatprep.subr.bf16.mxu0 0
        %422 = vmatpush1.bf16.msra.mxu0 0
        %423 = vmatprep.subr.bf16.mxu0 0
        %424 = vmatpush1.bf16.msra.mxu0 0
        %425 = vmatprep.mubr.bf16.mxu0 0
        %426 = vmatmul.mubr.bf16.gmra.mrb[0].mxu0 %v388
        %v427 = vpop.f32.mrb[0].mxu0
        %v428 = vadd.f32 %v362, %v427
        %v429 = vpop.f32.mrb[0].mxu0
        %v430 = vpop.f32.mrb[0].mxu0
        %v431 = vadd.f32 %v362, %v430
        %v432 = vpop.f32.mrb[0].mxu0
        %433 = vmatprep.mubr.bf16.mxu0 0
        %434 = vmatmul.mubr.bf16.gmra.mrb[0].mxu0 %v391
        %v435 = vpop.f32.mrb[0].mxu0
        %v436 = vadd.f32 %v362, %v435
        %v437 = vpop.f32.mrb[0].mxu0
        %v438 = vpop.f32.mrb[0].mxu0
        %v439 = vadd.f32 %v362, %v438
        %v440 = vpop.f32.mrb[0].mxu0
        %441 = vdwg.mxu0
        %v442 = vld [vmem:[#allocation11] sm:$0xf]
        %v443 = vld [vmem:[#allocation11 + $0x4] sm:$0xf]
        %v444 = vld [vmem:[#allocation11 + $0x8] sm:$0xf]
        %v445 = vld [vmem:[#allocation11 + $0xc] sm:$0xf]
        %v446 = vld [vmem:[%s5] sm:$0x1]
        %v448 = vlaneseq
        %v449 = vshrl.u32 %v448, 7
        %v450 = vsub.s32 0, %v449
        %v451 = vrot.slane %v446, %v450
        %v457 = vunpack.c.l.b16 %v349
        %v458 = vunpack.c.l.b16 %v350
        %v459 = vunpack.c.l.b16 %v351
        %v460 = vunpack.c.l.b16 %v352
        %v461 = vpack.c.b16 %v458, %v457
        %v462 = vpack.c.b16 %v460, %v459
        %v467 = vunpack.c.l.b16 %v442
        %v468 = vunpack.c.l.b16 %v443
        %v469 = vunpack.c.l.b16 %v444
        %v470 = vunpack.c.l.b16 %v445
        %v471 = vpack.c.b16 %v468, %v467
        %v472 = vpack.c.b16 %v470, %v469
        %v476 = vsel %vm386, %v461, 0
        %v479 = vsel %vm386, %v462, 0
        %481 = vmatprep.subr.bf16.mxu0 0
        %482 = vmatpush1.bf16.msra.mxu0 %v471
        %483 = vmatprep.subr.bf16.mxu0 0
        %484 = vmatpush1.bf16.msra.mxu0 %v472
        %485 = vmatprep.subr.bf16.mxu0 0
        %486 = vmatpush1.bf16.msra.mxu0 0
        %487 = vmatprep.subr.bf16.mxu0 0
        %488 = vmatpush1.bf16.msra.mxu0 0
        %489 = vmatprep.subr.bf16.mxu0 0
        %490 = vmatpush1.bf16.msra.mxu0 0
        %491 = vmatprep.subr.bf16.mxu0 0
        %492 = vmatpush1.bf16.msra.mxu0 0
        %493 = vmatprep.subr.bf16.mxu0 0
        %494 = vmatpush1.bf16.msra.mxu0 0
        %495 = vmatprep.subr.bf16.mxu0 0
        %496 = vmatpush1.bf16.msra.mxu0 0
        %497 = vmatprep.subr.bf16.mxu0 0
        %498 = vmatpush1.bf16.msra.mxu0 0
        %499 = vmatprep.subr.bf16.mxu0 0
        %500 = vmatpush1.bf16.msra.mxu0 0
        %501 = vmatprep.subr.bf16.mxu0 0
        %502 = vmatpush1.bf16.msra.mxu0 0
        %503 = vmatprep.subr.bf16.mxu0 0
        %504 = vmatpush1.bf16.msra.mxu0 0
        %505 = vmatprep.subr.bf16.mxu0 0
        %506 = vmatpush1.bf16.msra.mxu0 0
        %507 = vmatprep.subr.bf16.mxu0 0
        %508 = vmatpush1.bf16.msra.mxu0 0
        %509 = vmatprep.subr.bf16.mxu0 0
        %510 = vmatpush1.bf16.msra.mxu0 0
        %511 = vmatprep.subr.bf16.mxu0 0
        %512 = vmatpush1.bf16.msra.mxu0 0
        %513 = vmatprep.mubr.bf16.mxu0 0
        %514 = vmatmul.mubr.bf16.gmra.mrb[0].mxu0 %v476
        %v515 = vpop.f32.mrb[0].mxu0
        %v516 = vadd.f32 %v451, %v515
        %v517 = vpop.f32.mrb[0].mxu0
        %v518 = vpop.f32.mrb[0].mxu0
        %v519 = vadd.f32 %v451, %v518
        %v520 = vpop.f32.mrb[0].mxu0
        %521 = vmatprep.mubr.bf16.mxu0 0
        %522 = vmatmul.mubr.bf16.gmra.mrb[0].mxu0 %v479
        %v523 = vpop.f32.mrb[0].mxu0
        %v524 = vadd.f32 %v451, %v523
        %v525 = vpop.f32.mrb[0].mxu0
        %v526 = vpop.f32.mrb[0].mxu0
        %v527 = vadd.f32 %v451, %v526
        %v528 = vpop.f32.mrb[0].mxu0
        %529 = vdwg.mxu0
        %v530 = vpack.c.bf16 %v431, %v428
        %v531 = vpack.c.bf16 %v439, %v436
        %532 = vst.msk [vmem:[#allocation2] sm:$0xff] %vm386, %v530
        %533 = vst.msk [vmem:[#allocation2 + $0x8] sm:$0xff] %vm386, %v531
        %v534 = vpack.c.bf16 %v519, %v516
        %v535 = vpack.c.bf16 %v527, %v524
        %536 = vst.msk [vmem:[#allocation3] sm:$0xff] %vm386, %v534
        %537 = vst.msk [vmem:[#allocation3 + $0x8] sm:$0xff] %vm386, %v535
        %540 = vrot.lane.b32.xlu0 %v534, 96
        %v541 = vpop.permute.xlu0 %540
        %542 = vrot.lane.b32.xlu0 %v535, 96
        %v543 = vpop.permute.xlu0 %542
        %546 = vst.msk [vmem:[#allocation4] sm:$0xff] %vm386, %v541
        %547 = vst.msk [vmem:[#allocation4 + $0x8] sm:$0xff] %vm386, %v543
        loop: start=0, step=1, limit=2
        $region61: #{tpu_custom_call.1} parent=43 // loop_pre_header
          _
        $region62: #{tpu_custom_call.1} parent=43 // loop_header
          %s549 = sphi 0, %s553
          %p550 = scmp.ge.s32.totalorder %s549, 2
        $region63: #{tpu_custom_call.1} parent=43 // loop_header_branch
          %552 = sbr.rel (%p550) target = $region67
        $region64: #{tpu_custom_call.1} parent=43 // loop_body
          %s554 = smul.addr %s549, 8
          %s555 = scalar_lea.vmem [#allocation2], %s554
          %v556 = vld [vmem:[%s555] sm:$0xff]
          %s557 = smul.addr %s549, 8
          %s558 = scalar_lea.vmem [#allocation3], %s557
          %v559 = vld [vmem:[%s558] sm:$0xff]
          %s560 = smul.addr %s549, 8
          %s561 = scalar_lea.vmem [#allocation4], %s560
          %v562 = vld [vmem:[%s561] sm:$0xff]
          %vm563 = vcmask 130048
          %v565 = vsel %vm563, %v556, 0
          %v568 = vsel %vm563, %v559, 0
          %570 = vmatprep.subr.bf16.mxu0 0
          %571 = vmatpush1.bf16.xpose.msra.mxu0 %v568
          %572 = vmatprep.subr.bf16.mxu0 0
          %573 = vmatpush1.bf16.xpose.msra.mxu0 0
          %574 = vmatprep.subr.bf16.mxu0 0
          %575 = vmatpush1.bf16.xpose.msra.mxu0 0
          %576 = vmatprep.subr.bf16.mxu0 0
          %577 = vmatpush1.bf16.xpose.msra.mxu0 0
          %578 = vmatprep.subr.bf16.mxu0 0
          %579 = vmatpush1.bf16.xpose.msra.mxu0 0
          %580 = vmatprep.subr.bf16.mxu0 0
          %581 = vmatpush1.bf16.xpose.msra.mxu0 0
          %582 = vmatprep.subr.bf16.mxu0 0
          %583 = vmatpush1.bf16.xpose.msra.mxu0 0
          %584 = vmatprep.subr.bf16.mxu0 0
          %585 = vmatpush1.bf16.xpose.msra.mxu0 0
          %586 = vmatprep.subr.bf16.mxu0 0
          %587 = vmatpush1.bf16.xpose.msra.mxu0 0
          %588 = vmatprep.subr.bf16.mxu0 0
          %589 = vmatpush1.bf16.xpose.msra.mxu0 0
          %590 = vmatprep.subr.bf16.mxu0 0
          %591 = vmatpush1.bf16.xpose.msra.mxu0 0
          %592 = vmatprep.subr.bf16.mxu0 0
          %593 = vmatpush1.bf16.xpose.msra.mxu0 0
          %594 = vmatprep.subr.bf16.mxu0 0
          %595 = vmatpush1.bf16.xpose.msra.mxu0 0
          %596 = vmatprep.subr.bf16.mxu0 0
          %597 = vmatpush1.bf16.xpose.msra.mxu0 0
          %598 = vmatprep.subr.bf16.mxu0 0
          %599 = vmatpush1.bf16.xpose.msra.mxu0 0
          %600 = vmatprep.subr.bf16.mxu0 0
          %601 = vmatpush1.bf16.xpose.msra.mxu0 0
          %602 = vmatprep.mubr.bf16.mxu0 0
          %603 = vmatmul.mubr.bf16.gmra.mrb[0].mxu0 %v565
          %v604 = vpop.f32.mrb[0].mxu0
          %v605 = vadd.f32 0.0, %v604
          %v606 = vpop.f32.mrb[0].mxu0
          %v607 = vpop.f32.mrb[0].mxu0
          %v608 = vadd.f32 0.0, %v607
          %v609 = vpop.f32.mrb[0].mxu0
          %610 = vdwg.mxu0
          %v611 = vsel %vm563, %v605, -inf
          %612 = vmax.xlane.f32.xlu0 %v611
          %v613 = vpop.xlane.xlu0 %612
          %v614 = vsel %vm563, %v608, -inf
          %615 = vmax.xlane.f32.xlu0 %v614
          %v616 = vpop.xlane.xlu0 %615
          %v617 = vsub.f32 %v605, %v613
          %v618 = vsub.f32 %v608, %v616
          %v619 = vmul.f32 %v617, 1.442695
          %v620 = vpow.pop %v619
          %v621 = vmul.f32 %v618, 1.442695
          %v622 = vpow.pop %v621
          %v623 = vsel %vm563, %v620, 0.0
          %624 = vadd.xlane.f32.xlu0 %v623
          %v625 = vpop.xlane.xlu0 %624
          %v626 = vsel %vm563, %v622, 0.0
          %627 = vadd.xlane.f32.xlu0 %v626
          %v628 = vpop.xlane.xlu0 %627
          %v629 = vrcp.pop %v625
          %v630 = vrcp.pop %v628
          %v631 = vmul.f32 %v620, %v629
          %v632 = vmul.f32 %v622, %v630
          %v633 = vpack.c.bf16 %v632, %v631
          %v635 = vsel %vm563, %v633, 0
          %637 = vmatprep.subr.bf16.mxu0 0
          %638 = vmatpush1.bf16.msra.mxu0 %v562
          %639 = vmatprep.subr.bf16.mxu0 0
          %640 = vmatpush1.bf16.msra.mxu0 0
          %641 = vmatprep.subr.bf16.mxu0 0
          %642 = vmatpush1.bf16.msra.mxu0 0
          %643 = vmatprep.subr.bf16.mxu0 0
          %644 = vmatpush1.bf16.msra.mxu0 0
          %645 = vmatprep.subr.bf16.mxu0 0
          %646 = vmatpush1.bf16.msra.mxu0 0
          %647 = vmatprep.subr.bf16.mxu0 0
          %648 = vmatpush1.bf16.msra.mxu0 0
          %649 = vmatprep.subr.bf16.mxu0 0
          %650 = vmatpush1.bf16.msra.mxu0 0
          %651 = vmatprep.subr.bf16.mxu0 0
          %652 = vmatpush1.bf16.msra.mxu0 0
          %653 = vmatprep.subr.bf16.mxu0 0
          %654 = vmatpush1.bf16.msra.mxu0 0
          %655 = vmatprep.subr.bf16.mxu0 0
          %656 = vmatpush1.bf16.msra.mxu0 0
          %657 = vmatprep.subr.bf16.mxu0 0
          %658 = vmatpush1.bf16.msra.mxu0 0
          %659 = vmatprep.subr.bf16.mxu0 0
          %660 = vmatpush1.bf16.msra.mxu0 0
          %661 = vmatprep.subr.bf16.mxu0 0
          %662 = vmatpush1.bf16.msra.mxu0 0
          %663 = vmatprep.subr.bf16.mxu0 0
          %664 = vmatpush1.bf16.msra.mxu0 0
          %665 = vmatprep.subr.bf16.mxu0 0
          %666 = vmatpush1.bf16.msra.mxu0 0
          %667 = vmatprep.subr.bf16.mxu0 0
          %668 = vmatpush1.bf16.msra.mxu0 0
          %669 = vmatprep.mubr.bf16.mxu0 0
          %670 = vmatmul.mubr.bf16.gmra.mrb[0].mxu0 %v635
          %v671 = vpop.f32.mrb[0].mxu0
          %v672 = vadd.f32 0.0, %v671
          %v673 = vpop.f32.mrb[0].mxu0
          %v674 = vpop.f32.mrb[0].mxu0
          %v675 = vadd.f32 0.0, %v674
          %v676 = vpop.f32.mrb[0].mxu0
          %677 = vdwg.mxu0
          %679 = vrot.lane.b32.xlu0 %v556, 112
          %v680 = vpop.permute.xlu0 %679
          %682 = vrot.lane.b32.xlu0 %v559, 112
          %v683 = vpop.permute.xlu0 %682
          %v685 = vsel %vm563, %v680, 0
          %v688 = vsel %vm563, %v683, 0
          %690 = vmatprep.subr.bf16.mxu0 0
          %691 = vmatpush1.bf16.xpose.msra.mxu0 %v688
          %692 = vmatprep.subr.bf16.mxu0 0
          %693 = vmatpush1.bf16.xpose.msra.mxu0 0
          %694 = vmatprep.subr.bf16.mxu0 0
          %695 = vmatpush1.bf16.xpose.msra.mxu0 0
          %696 = vmatprep.subr.bf16.mxu0 0
          %697 = vmatpush1.bf16.xpose.msra.mxu0 0
          %698 = vmatprep.subr.bf16.mxu0 0
          %699 = vmatpush1.bf16.xpose.msra.mxu0 0
          %700 = vmatprep.subr.bf16.mxu0 0
          %701 = vmatpush1.bf16.xpose.msra.mxu0 0
          %702 = vmatprep.subr.bf16.mxu0 0
          %703 = vmatpush1.bf16.xpose.msra.mxu0 0
          %704 = vmatprep.subr.bf16.mxu0 0
          %705 = vmatpush1.bf16.xpose.msra.mxu0 0
          %706 = vmatprep.subr.bf16.mxu0 0
          %707 = vmatpush1.bf16.xpose.msra.mxu0 0
          %708 = vmatprep.subr.bf16.mxu0 0
          %709 = vmatpush1.bf16.xpose.msra.mxu0 0
          %710 = vmatprep.subr.bf16.mxu0 0
          %711 = vmatpush1.bf16.xpose.msra.mxu0 0
          %712 = vmatprep.subr.bf16.mxu0 0
          %713 = vmatpush1.bf16.xpose.msra.mxu0 0
          %714 = vmatprep.subr.bf16.mxu0 0
          %715 = vmatpush1.bf16.xpose.msra.mxu0 0
          %716 = vmatprep.subr.bf16.mxu0 0
          %717 = vmatpush1.bf16.xpose.msra.mxu0 0
          %718 = vmatprep.subr.bf16.mxu0 0
          %719 = vmatpush1.bf16.xpose.msra.mxu0 0
          %720 = vmatprep.subr.bf16.mxu0 0
          %721 = vmatpush1.bf16.xpose.msra.mxu0 0
          %722 = vmatprep.mubr.bf16.mxu0 0
          %723 = vmatmul.mubr.bf16.gmra.mrb[0].mxu0 %v685
          %v724 = vpop.f32.mrb[0].mxu0
          %v725 = vadd.f32 0.0, %v724
          %v726 = vpop.f32.mrb[0].mxu0
          %v727 = vpop.f32.mrb[0].mxu0
          %v728 = vadd.f32 0.0, %v727
          %v729 = vpop.f32.mrb[0].mxu0
          %730 = vdwg.mxu0
          %v731 = vsel %vm563, %v725, -inf
          %732 = vmax.xlane.f32.xlu0 %v731
          %v733 = vpop.xlane.xlu0 %732
          %v734 = vsel %vm563, %v728, -inf
          %735 = vmax.xlane.f32.xlu0 %v734
          %v736 = vpop.xlane.xlu0 %735
          %v737 = vsub.f32 %v725, %v733
          %v738 = vsub.f32 %v728, %v736
          %v739 = vmul.f32 %v737, 1.442695
          %v740 = vpow.pop %v739
          %v741 = vmul.f32 %v738, 1.442695
          %v742 = vpow.pop %v741
          %v743 = vsel %vm563, %v740, 0.0
          %744 = vadd.xlane.f32.xlu0 %v743
          %v745 = vpop.xlane.xlu0 %744
          %v746 = vsel %vm563, %v742, 0.0
          %747 = vadd.xlane.f32.xlu0 %v746
          %v748 = vpop.xlane.xlu0 %747
          %v749 = vrcp.pop %v745
          %v750 = vrcp.pop %v748
          %v751 = vmul.f32 %v740, %v749
          %v752 = vmul.f32 %v742, %v750
          %v753 = vpack.c.bf16 %v752, %v751
          %755 = vrot.lane.b32.xlu0 %v562, 112
          %v756 = vpop.permute.xlu0 %755
          %v759 = vsel %vm563, %v753, 0
          %761 = vmatprep.subr.bf16.mxu0 0
          %762 = vmatpush1.bf16.msra.mxu0 %v756
          %763 = vmatprep.subr.bf16.mxu0 0
          %764 = vmatpush1.bf16.msra.mxu0 0
          %765 = vmatprep.subr.bf16.mxu0 0
          %766 = vmatpush1.bf16.msra.mxu0 0
          %767 = vmatprep.subr.bf16.mxu0 0
          %768 = vmatpush1.bf16.msra.mxu0 0
          %769 = vmatprep.subr.bf16.mxu0 0
          %770 = vmatpush1.bf16.msra.mxu0 0
          %771 = vmatprep.subr.bf16.mxu0 0
          %772 = vmatpush1.bf16.msra.mxu0 0
          %773 = vmatprep.subr.bf16.mxu0 0
          %774 = vmatpush1.bf16.msra.mxu0 0
          %775 = vmatprep.subr.bf16.mxu0 0
          %776 = vmatpush1.bf16.msra.mxu0 0
          %777 = vmatprep.subr.bf16.mxu0 0
          %778 = vmatpush1.bf16.msra.mxu0 0
          %779 = vmatprep.subr.bf16.mxu0 0
          %780 = vmatpush1.bf16.msra.mxu0 0
          %781 = vmatprep.subr.bf16.mxu0 0
          %782 = vmatpush1.bf16.msra.mxu0 0
          %783 = vmatprep.subr.bf16.mxu0 0
          %784 = vmatpush1.bf16.msra.mxu0 0
          %785 = vmatprep.subr.bf16.mxu0 0
          %786 = vmatpush1.bf16.msra.mxu0 0
          %787 = vmatprep.subr.bf16.mxu0 0
          %788 = vmatpush1.bf16.msra.mxu0 0
          %789 = vmatprep.subr.bf16.mxu0 0
          %790 = vmatpush1.bf16.msra.mxu0 0
          %791 = vmatprep.subr.bf16.mxu0 0
          %792 = vmatpush1.bf16.msra.mxu0 0
          %793 = vmatprep.mubr.bf16.mxu0 0
          %794 = vmatmul.mubr.bf16.gmra.mrb[0].mxu0 %v759
          %v795 = vpop.f32.mrb[0].mxu0
          %v796 = vadd.f32 0.0, %v795
          %v797 = vpop.f32.mrb[0].mxu0
          %v798 = vpop.f32.mrb[0].mxu0
          %v799 = vadd.f32 0.0, %v798
          %v800 = vpop.f32.mrb[0].mxu0
          %801 = vdwg.mxu0
          %804 = vrot.lane.b32.xlu0 %v796, 16
          %v805 = vpop.permute.xlu0 %804
          %806 = vrot.lane.b32.xlu0 %v799, 16
          %v807 = vpop.permute.xlu0 %806
          %v810 = vsel %vm563, %v672, %v805
          %v811 = vsel %vm563, %v675, %v807
          %s812 = smul.u32 %s549, 16
          %s813 = scalar_lea.vmem %s340, %s812 [#allocation13]
          %814 = vst.msk [vmem:[%s813] sm:$0xff] %vm386, %v810
          %815 = vst.msk [vmem:[%s813 + $0x8] sm:$0xff] %vm386, %v811
        $region65: #{tpu_custom_call.1} parent=43 // loop_footer
          %s553 = sadd.s32 1, %s549
        $region66: #{tpu_custom_call.1} parent=43 // loop_footer_branch
          %548 = sbr.rel target = $region62
        $region67: #{tpu_custom_call.1} parent=43 // loop_exit
          _
        %s816 = sand.u32 %s171, 1
        %s817 = scalar_lea.sflag [#allocation7], %s816
        %s818 = sand.u32 %s171, 1
        %s819 = smul.addr %s818, 32
        %s820 = scalar_lea.vmem [#allocation13], %s819
        // Predicated region
        $region68: #{tpu_custom_call.1} parent=43 // pred_check
          %p821 = pneg %p181
        $region69: #{tpu_custom_call.1} parent=43 // pred_check_branch
          %823 = sbr.rel (%p821) target = $region71
        $region70: #{tpu_custom_call.1} parent=43 // pred_region
          %s824 = smul.u32 2, %s27
          %s826 = ssub.s32 512, 512
          %827 = vsyncadd %s817, %s826
          %s828 = smul.addr %s824, 2
          %s829 = smul.addr %s828, 128
          %s830 = scalar_lea.hbm %s6, %s829
          %s831 = sshll.u32 %s820, 4
          %s832 = int_to_ptr.vmem [resolvable:$true] %s831
          %837 = dma.vmem_to_hbm [thread:$0]  %s832, 512, %s830, %s817, 128, 128, 8
        $region71: #{tpu_custom_call.1} parent=43 // pred_fallthru
          _
      $region44: #{tpu_custom_call.1} parent=5 // pred_fallthru
        _
      %p838 = scmp.le.s32.totalorder 2, %s22
      // Predicated region
      $region72: #{tpu_custom_call.1} parent=5 // pred_check
        %p839 = pneg %p838
      $region73: #{tpu_custom_call.1} parent=5 // pred_check_branch
        %841 = sbr.rel (%p839) target = $region75
      $region74: #{tpu_custom_call.1} parent=5 // pred_region
        %s842 = ssub.s32 %s22, 2
        // Predicated region
        $region76: #{tpu_custom_call.1} parent=74 // pred_check
          %p843 = pneg %p187
        $region77: #{tpu_custom_call.1} parent=74 // pred_check_branch
          %845 = sbr.rel (%p843) target = $region79
        $region78: #{tpu_custom_call.1} parent=74 // pred_region
          %s846 = sand.u32 %s172, 1
          %s847 = scalar_lea.sflag [#allocation7], %s846
          %s848 = sand.u32 %s172, 1
          %s849 = smul.addr %s848, 32
          %s850 = scalar_lea.vmem [#allocation13], %s849
          %851 = dma.done %s847, 512
        $region79: #{tpu_custom_call.1} parent=74 // pred_fallthru
          _
      $region75: #{tpu_custom_call.1} parent=5 // pred_fallthru
        _
    $region6: #{tpu_custom_call.1} parent=1 // loop_footer
      %s26 = sadd.s32 1, %s22
    $region7: #{tpu_custom_call.1} parent=1 // loop_footer_branch
      %21 = sbr.rel target = $region3
    $region8: #{tpu_custom_call.1} parent=1 // loop_exit
      _
    %852 = vsyncpa [#allocation6], 1
    %s853 = scalar_lea.sflag [#allocation6], 1
    %854 = vsyncpa %s853, 1
    %855 = vsyncpa [#allocation9], 1
    %s856 = scalar_lea.sflag [#allocation9], 1
    %857 = vsyncpa %s856, 1
    %858 = vsyncpa [#allocation12], 1
    %859 = vsyncpa [#allocation7], 1
    %s860 = scalar_lea.sflag [#allocation7], 1
    %861 = vsyncpa %s860, 1

</llo_original>
